<compile_context>
chip_gen: v6e
topology: v6e:2x2x1
jax: 0.10.0
libtpu: 0.0.40
codegen_flags: <defaults>
</compile_context>

<pallas_src>
import jax
import jax.numpy as jnp
from jax import lax
from jax.experimental import pallas as pl
from jax.experimental.pallas import tpu as pltpu


_VMEM_LIMIT_BYTES = 48 * 1024 * 1024          # under v7x's 64 MiB physical VMEM
_WEIGHT_TILE_BUDGET_BYTES = 8 * 1024 * 1024   # per streamed weight buffer


# ---------------------------------------------------------------------------
# Kernels
# ---------------------------------------------------------------------------
def _encoder_kernel(x_ref, w1_ref, part_ref, acc_ref):
    """Partial of x @ W1^T for one K-split.

    Grid = (num_k_splits ["parallel"], k_steps_per_split ["arbitrary"]).
    W1 is streamed in its native (code_dims, k_tile) lane-dense layout and
    contracted on its last axis, so no transposed W1 copy is ever materialized.
    """
    k = pl.program_id(1)

    @pl.when(k == 0)
    def _():
        acc_ref[...] = jnp.zeros_like(acc_ref)

    x = x_ref[...].astype(w1_ref.dtype)              # in-kernel bf16 cast of x
    acc_ref[...] += lax.dot_general(
        x, w1_ref[...],
        dimension_numbers=(((1,), (1,)), ((), ())),  # contract input_dims axes
        preferred_element_type=jnp.float32,
    )

    @pl.when(k == pl.num_programs(1) - 1)
    def _():
        part_ref[...] = acc_ref[...]                 # f32 partial sum


def _decoder_kernel(part_ref, b1_ref, w2t_ref, b2_ref, o_ref):
    """out_tile = sigmoid(relu(sum_splits(partials) + b1) @ W2^T_tile + b2_tile)."""
    h = jnp.sum(part_ref[...], axis=0) + b1_ref[...]          # (B, C) in f32
    h = jnp.maximum(h, 0.0).astype(w2t_ref.dtype)             # bf16 MXU operand
    y = jnp.dot(h, w2t_ref[...], preferred_element_type=jnp.float32)
    y = y + b2_ref[...]
    o_ref[...] = jax.nn.sigmoid(y).astype(o_ref.dtype)


# ---------------------------------------------------------------------------
# Tile selection
# ---------------------------------------------------------------------------
def _aligned_divisors(dim, align=128):
    tiles = [t for t in range(align, dim + 1, align) if dim % t == 0]
    if not tiles or tiles[-1] != dim:
        tiles.append(dim)
    return tiles


def _pick_tile(dim, rows, itemsize, budget_bytes=_WEIGHT_TILE_BUDGET_BYTES, align=128):
    """Largest 128-aligned divisor of `dim` whose (rows x tile) weight slab fits budget."""
    if dim <= align:
        return dim
    best = None
    for t in _aligned_divisors(dim, align):
        if t * rows * itemsize <= budget_bytes:
            best = t
    return best if best is not None else _aligned_divisors(dim, align)[0]


# ---------------------------------------------------------------------------
# Wrappers
# ---------------------------------------------------------------------------
def prepare_params(w1, b1, w2, b2, *, compute_dtype=jnp.bfloat16):
    """One-time weight prep. Call ONCE and reuse the result across forward calls.

    w1: (code_dims, input_dims), w2: (input_dims, code_dims)  (PyTorch (out, in)).
    """
    code_dims, input_dims = w1.shape
    assert w2.shape == (input_dims, code_dims)
    assert b1.shape == (code_dims,)
    assert b2.shape == (input_dims,)
    return {
        "w1": w1.astype(compute_dtype),                      # native layout, lane-dense tiles
        "b1": b1.reshape(1, code_dims).astype(jnp.float32),
        "w2_t": w2.T.astype(compute_dtype),                  # (code_dims, input_dims), ONCE
        "b2": b2.reshape(1, input_dims).astype(jnp.float32),
    }


def few_shot_autoencoder_forward(x, params, *, k_tile=None, n_tile=None,
                                 num_k_splits=None):
    """x: (B, input_dims); params from prepare_params(). Returns (B, input_dims)."""
    w1, b1, w2_t, b2 = params["w1"], params["b1"], params["w2_t"], params["b2"]
    B, input_dims = x.shape
    code_dims = w1.shape[0]
    assert w1.shape == (code_dims, input_dims)
    assert w2_t.shape == (code_dims, input_dims)
    assert b1.shape == (1, code_dims)
    assert b2.shape == (1, input_dims)

    itemsize = jnp.dtype(w1.dtype).itemsize
    if k_tile is None:
        k_tile = _pick_tile(input_dims, code_dims, itemsize)
    if n_tile is None:
        n_tile = _pick_tile(input_dims, code_dims, itemsize)
    assert input_dims % k_tile == 0 and (k_tile == input_dims or k_tile % 128 == 0)
    assert input_dims % n_tile == 0 and (n_tile == input_dims or n_tile % 128 == 0)

    k_steps = input_dims // k_tile
    if num_k_splits is None:
        num_k_splits = 2 if (k_steps >= 2 and k_steps % 2 == 0) else 1
    if k_steps % num_k_splits != 0:
        num_k_splits = 1
    kps = k_steps // num_k_splits                     # steps per split (python int)

    # ---- Encoder: stream x / W1 along K; f32 partial per split ---------------
    partials = pl.pallas_call(
        _encoder_kernel,
        out_shape=jax.ShapeDtypeStruct((num_k_splits, B, code_dims), jnp.float32),
        grid_spec=pltpu.PrefetchScalarGridSpec(
            num_scalar_prefetch=0,
            grid=(num_k_splits, kps),
            in_specs=[
                pl.BlockSpec((B, k_tile), lambda s, k: (0, s * kps + k)),          # x tile
                pl.BlockSpec((code_dims, k_tile), lambda s, k: (0, s * kps + k)),  # W1 tile
            ],
            out_specs=pl.BlockSpec((None, B, code_dims), lambda s, k: (s, 0, 0)),
            scratch_shapes=[pltpu.VMEM((B, code_dims), jnp.float32)],
        ),
        compiler_params=pltpu.CompilerParams(
            dimension_semantics=("parallel", "arbitrary"),
            vmem_limit_bytes=_VMEM_LIMIT_BYTES,
        ),
    )(x, w1)

    # ---- Decoder: combine partials + b1 + ReLU, stream W2^T / b2 / out on N --
    out = pl.pallas_call(
        _decoder_kernel,
        out_shape=jax.ShapeDtypeStruct((B, input_dims), x.dtype),
        grid_spec=pltpu.PrefetchScalarGridSpec(
            num_scalar_prefetch=0,
            grid=(input_dims // n_tile,),
            in_specs=[
                pl.BlockSpec((num_k_splits, B, code_dims), lambda j: (0, 0, 0)),   # resident
                pl.BlockSpec((1, code_dims), lambda j: (0, 0)),                    # b1 resident
                pl.BlockSpec((code_dims, n_tile), lambda j: (0, j)),               # W2^T tile
                pl.BlockSpec((1, n_tile), lambda j: (0, j)),                       # b2 tile
            ],
            out_specs=pl.BlockSpec((B, n_tile), lambda j: (0, j)),                 # lane-dense
        ),
        compiler_params=pltpu.CompilerParams(
            dimension_semantics=("parallel",),
            vmem_limit_bytes=_VMEM_LIMIT_BYTES,
        ),
    )(partials, b1, w2_t, b2)

    return out


def few_shot_autoencoder_apply(x, w1, b1, w2, b2, **kwargs):
    """Convenience one-shot entry (prep + forward). Prefer caching prepare_params()."""
    return few_shot_autoencoder_forward(x, prepare_params(w1, b1, w2, b2), **kwargs)


# ---------------------------------------------------------------------------
# Self-test (small shapes; same structure as the real 256*13*13 feature)
# ---------------------------------------------------------------------------
if __name__ == "__main__":
    B = 8
    input_dims = 1024   # stands in for 256*13*13 = 43264
    code_dims = 128     # stands in for 100

    key = jax.random.PRNGKey(0)
    kx, kw1, kb1, kw2, kb2 = jax.random.split(key, 5)

    x = jax.random.normal(kx, (B, input_dims), dtype=jnp.float32)
    # PyTorch Linear stores W as (out, in); default uniform init bounds.
    bound1 = 1.0 / jnp.sqrt(input_dims)
    bound2 = 1.0 / jnp.sqrt(code_dims)
    w1 = jax.random.uniform(kw1, (code_dims, input_dims), jnp.float32, -bound1, bound1)
    b1 = jax.random.uniform(kb1, (code_dims,), jnp.float32, -bound1, bound1)
    w2 = jax.random.uniform(kw2, (input_dims, code_dims), jnp.float32, -bound2, bound2)
    b2 = jax.random.uniform(kb2, (input_dims,), jnp.float32, -bound2, bound2)

    # One-time weight prep (cached across calls in real use).
    params = prepare_params(w1, b1, w2, b2)

    # Explicit small tiles + a K split so the streamed multi-step paths are exercised.
    out = few_shot_autoencoder_forward(x, params, k_tile=256, n_tile=256, num_k_splits=2)
    out = jax.block_until_ready(out)
    assert out.shape == (B, input_dims)

    # Precision-matched reference (bf16 operands, f32 accumulation, f32 hidden).
    xb = x.astype(jnp.bfloat16)
    w1b = w1.astype(jnp.bfloat16)
    w2tb = w2.T.astype(jnp.bfloat16)
    h_ref = jnp.maximum(
        lax.dot_general(xb, w1b, (((1,), (1,)), ((), ())),
                        preferred_element_type=jnp.float32) + b1,
        0.0,
    )
    ref_bf16 = jax.nn.sigmoid(
        jnp.dot(h_ref.astype(jnp.bfloat16), w2tb, preferred_element_type=jnp.float32) + b2
    )
    assert jnp.allclose(out, ref_bf16, atol=2e-3, rtol=2e-3)

    # Full-f32 semantic sanity check (loose tolerance due to bf16 weights).
    ref_f32 = jax.nn.sigmoid(jnp.maximum(x @ w1.T + b1, 0.0) @ w2.T + b2)
    assert jnp.allclose(out, ref_f32, atol=5e-2, rtol=5e-2)

    print("KERNEL_OK")
</pallas_src>

<mosaic_0001>
module attributes {stable_mosaic.version = 11 : i64} {
  func.func @_encoder_kernel(%arg0: i32, %arg1: i32, %arg2: memref<8x256xf32, #tpu.memory_space<vmem>>, %arg3: memref<128x256xbf16, #tpu.memory_space<vmem>>, %arg4: memref<1x8x128xf32, #tpu.memory_space<vmem>>, %arg5: memref<8x128xf32, #tpu.memory_space<vmem>>) attributes {dimension_semantics = [#tpu.dimension_semantics<parallel>, #tpu.dimension_semantics<arbitrary>], iteration_bounds = array<i64: 2, 2>, scalar_prefetch = 0 : i64, scratch_operands = 1 : i64, tpu.core_type = #tpu.core_type<tc>, window_params = [{transform_indices = @transform_0, window_bounds = array<i64: 8, 256>}, {transform_indices = @transform_1, window_bounds = array<i64: 128, 256>}, {transform_indices = @transform_2, window_bounds = array<i64: 1, 8, 128>}]} {
    %c0_i32 = arith.constant 0 : i32
    %0 = arith.cmpi eq, %arg1, %c0_i32 : i32
    %1 = arith.extui %0 : i1 to i32
    %c0_i32_0 = arith.constant 0 : i32
    %2 = arith.cmpi ne, %1, %c0_i32_0 : i32
    scf.if %2 {
      %cst_9 = arith.constant 0.000000e+00 : f32
      %13 = vector.broadcast %cst_9 : f32 to vector<8x128xf32>
      %c0_10 = arith.constant 0 : index
      %c0_11 = arith.constant 0 : index
      %14 = vector.load %arg5[%c0_10, %c0_11] : memref<8x128xf32, #tpu.memory_space<vmem>>, vector<8x128xf32>
      tpu.vector_store %arg5[%c0_10, %c0_11], %13 {strides = array<i32>} : memref<8x128xf32, #tpu.memory_space<vmem>>, vector<8x128xf32>,
    } else {
    }
    %c0 = arith.constant 0 : index
    %c0_1 = arith.constant 0 : index
    %3 = vector.load %arg2[%c0, %c0_1] : memref<8x256xf32, #tpu.memory_space<vmem>>, vector<8x256xf32>
    %4 = arith.truncf %3 : vector<8x256xf32> to vector<8x256xbf16>
    %c0_2 = arith.constant 0 : index
    %c0_3 = arith.constant 0 : index
    %5 = vector.load %arg5[%c0_2, %c0_3] : memref<8x128xf32, #tpu.memory_space<vmem>>, vector<8x128xf32>
    %c0_4 = arith.constant 0 : index
    %c0_5 = arith.constant 0 : index
    %6 = vector.load %arg3[%c0_4, %c0_5] : memref<128x256xbf16, #tpu.memory_space<vmem>>, vector<128x256xbf16>
    %cst = arith.constant dense<0.000000e+00> : vector<8x128xf32>
    %7 = tpu.matmul %4, %6, %cst {dimension_numbers = #tpu.dot_dimension_numbers<[1], [1], [0], [0], [0, 0, 1, 0], [], []>} : vector<8x256xbf16>, vector<128x256xbf16>, vector<8x128xf32> -> vector<8x128xf32>
    %8 = arith.addf %5, %7 : vector<8x128xf32>
    %c0_6 = arith.constant 0 : index
    %c0_7 = arith.constant 0 : index
    %9 = vector.load %arg5[%c0_6, %c0_7] : memref<8x128xf32, #tpu.memory_space<vmem>>, vector<8x128xf32>
    tpu.vector_store %arg5[%c0_6, %c0_7], %8 {strides = array<i32>} : memref<8x128xf32, #tpu.memory_space<vmem>>, vector<8x128xf32>,
    %c1_i32 = arith.constant 1 : i32
    %10 = arith.cmpi eq, %arg1, %c1_i32 : i32
    %11 = arith.extui %10 : i1 to i32
    %c0_i32_8 = arith.constant 0 : i32
    %12 = arith.cmpi ne, %11, %c0_i32_8 : i32
    scf.if %12 {
      %c0_9 = arith.constant 0 : index
      %c0_10 = arith.constant 0 : index
      %13 = vector.load %arg5[%c0_9, %c0_10] : memref<8x128xf32, #tpu.memory_space<vmem>>, vector<8x128xf32>
      %c0_11 = arith.constant 0 : index
      %c0_12 = arith.constant 0 : index
      %c0_13 = arith.constant 0 : index
      %14 = vector.load %arg4[%c0_11, %c0_12, %c0_13] : memref<1x8x128xf32, #tpu.memory_space<vmem>>, vector<1x8x128xf32>
      %15 = vector.shape_cast %14 : vector<1x8x128xf32> to vector<8x128xf32>
      %16 = vector.shape_cast %13 : vector<8x128xf32> to vector<1x8x128xf32>
      tpu.vector_store %arg4[%c0_11, %c0_12, %c0_13], %16 {strides = array<i32>} : memref<1x8x128xf32, #tpu.memory_space<vmem>>, vector<1x8x128xf32>,
    } else {
    }
    return
  }
  func.func @transform_0(%arg0: i32, %arg1: i32) -> (i32, i32) {
    %c2_i32 = arith.constant 2 : i32
    %0 = arith.muli %arg0, %c2_i32 : i32
    %1 = arith.addi %0, %arg1 : i32
    %c0_i32 = arith.constant 0 : i32
    %c0_i32_0 = arith.constant 0 : i32
    return %c0_i32, %1 : i32, i32
  }
  func.func @transform_1(%arg0: i32, %arg1: i32) -> (i32, i32) {
    %c2_i32 = arith.constant 2 : i32
    %0 = arith.muli %arg0, %c2_i32 : i32
    %1 = arith.addi %0, %arg1 : i32
    %c0_i32 = arith.constant 0 : i32
    %c0_i32_0 = arith.constant 0 : i32
    return %c0_i32, %1 : i32, i32
  }
  func.func @transform_2(%arg0: i32, %arg1: i32) -> (i32, i32, i32) {
    %c0_i32 = arith.constant 0 : i32
    %c0_i32_0 = arith.constant 0 : i32
    %c0_i32_1 = arith.constant 0 : i32
    return %arg0, %c0_i32, %c0_i32_0 : i32, i32, i32
  }
}

</mosaic_0001>

<llo_original>
// kernel: tpu_custom_call.1
$region0: #{tpu_custom_call.1}
  #allocation0 [shape = 'u32[]', space=smem, size = 0x4, offset = 0x4, fixed_abs, tag = 'smem constant byte address 0x4 - core index']
  #allocation1 [shape = 'u32[144,128]{1,0:T(1,128)}', space=vmem, size = 0x12000, scoped, tag = 'internal scratch']
  #allocation2 [shape = 'f32[8,128]{1,0:T(8,128)}', space=vmem, size = 0x1000, scoped, tag = 'scratch operand']
  %s0 = inlined_call_operand.hbm [shape: f32[8,1024], index: 0, kind: input, shape index: {}]
  %s1 = inlined_call_operand.hbm [shape: bf16[128,1024], index: 1, kind: input, shape index: {}]
  %s2 = inlined_call_operand.hbm [shape: f32[2,8,128], index: 2, kind: output, shape index: {}]
  %s3 = sld [smem:[#allocation0]]
  $region57: #{tpu_custom_call.1} parent=0
    _
  %s5 = ssub.s32 1, %s3
  %s6 = scalar_select 0, %s5, %s3
  $region1: #{tpu_custom_call.1} parent=0
    #allocation3 [shape = 'u8[16384]{0}', space=vmem, size = 0x4000, scoped, tag = 'input window, operand 0']
    #allocation4 [shape = 's32[2]{0}', space=sflag, size = 0x8, scoped, tag = 'scoped memory for tpu_custom_call.1']
    #allocation5 [shape = 's32[2]{0}', space=sflag, size = 0x8, scoped, tag = 'scoped memory for tpu_custom_call.1']
    #allocation6 [shape = 'u8[131072]{0}', space=vmem, size = 0x20000, scoped, tag = 'input window, operand 1']
    #allocation7 [shape = 's32[2]{0}', space=sflag, size = 0x8, scoped, tag = 'scoped memory for tpu_custom_call.1']
    #allocation8 [shape = 'u8[8192]{0}', space=vmem, size = 0x2000, scoped, tag = 'output window, operand 0']
    %7 = vsyncpa [#allocation4], 0
    %s8 = scalar_lea.sflag [#allocation4], 1
    %9 = vsyncpa %s8, 0
    %10 = vsyncpa [#allocation7], 0
    %s11 = scalar_lea.sflag [#allocation7], 1
    %12 = vsyncpa %s11, 0
    %13 = vsyncpa [#allocation5], 0
    %s14 = scalar_lea.sflag [#allocation5], 1
    %15 = vsyncpa %s14, 0
    loop: start=0, step=1, limit=6
    $region2: #{tpu_custom_call.1} parent=1 // loop_pre_header
      _
    $region3: #{tpu_custom_call.1} parent=1 // loop_header
      %s17 = sphi 0, %s21
      %p18 = scmp.ge.s32.totalorder %s17, 6
      %s24 = sphi 0, %s36
      %s25 = sphi 0, %s32
      %s26 = sphi 0, %s24
      %s27 = sphi 0, %s25
      %s28 = sphi 0, %s26
      %s29 = sphi 0, %s27
      %s43 = sphi 0, %s45
      %s46 = sphi 0, %s43
      %s47 = sphi 0, %s46
      %s63 = sphi 0, %s47
      %s73 = sphi 0, %s75
      %s76 = sphi 0, %s73
      %s77 = sphi 0, %s76
      %s93 = sphi 0, %s77
      %s99 = sphi 0, %s101
      %s102 = sphi 0, %s99
      %s103 = sphi 0, %s102
      %s119 = sphi 0, %s103
    $region4: #{tpu_custom_call.1} parent=1 // loop_header_branch
      %20 = sbr.rel (%p18) target = $region8
    $region5: #{tpu_custom_call.1} parent=1 // loop_body
      %s22 = ssub.s32 %s17, 1
      %s23 = ssub.s32 %s17, 2
      %s30 = sadd.s32 1, %s25
      %p31 = scmp.ge.s32.totalorder %s30, 2
      %s32 = scalar_select %p31, 0, %s30
      %s33 = sadd.s32 1, %s24
      %s34 = scalar_select %p31, %s33, %s24
      %p35 = scmp.ge.s32.totalorder %s34, 2
      %s36 = scalar_select %p35, 0, %s34
      %s37 = smul.u32 %s24, 2
      %s38 = sadd.s32 %s37, %s25
      %s39 = smul.u32 %s36, 2
      %s40 = sadd.s32 %s39, %s32
      %s41 = ssub.s32 %s38, %s40
      %p42 = scmp.eq.s32.totalorder %s41, 0
      %s44 = sadd.s32 %s43, 1
      %s45 = scalar_select %p42, %s43, %s44
      %p48 = pneg %p42
      %p49 = scmp.eq.s32.totalorder %s17, 3
      %p50 = por %p48, %p49
      %p51 = scmp.ne.s32.totalorder %s43, %s46
      %p52 = scmp.eq.s32.totalorder %s17, 0
      %p53 = por %p51, %p52
      %p54 = scmp.ne.s32.totalorder %s43, %s46
      %p55 = scmp.eq.s32.totalorder %s22, 3
      %p56 = por %p54, %p55
      %p57 = scmp.ne.s32.totalorder %s46, %s47
      %p58 = scmp.eq.s32.totalorder %s22, 0
      %p59 = por %p57, %p58
      %p60 = scmp.ne.s32.totalorder %s46, %s47
      %p61 = scmp.eq.s32.totalorder %s23, 3
      %p62 = por %p60, %p61
      %p64 = scmp.ne.s32.totalorder %s47, %s63
      %p65 = scmp.eq.s32.totalorder %s23, 0
      %p66 = por %p64, %p65
      %s67 = smul.u32 %s24, 2
      %s68 = sadd.s32 %s67, %s25
      %s69 = smul.u32 %s36, 2
      %s70 = sadd.s32 %s69, %s32
      %s71 = ssub.s32 %s68, %s70
      %p72 = scmp.eq.s32.totalorder %s71, 0
      %s74 = sadd.s32 %s73, 1
      %s75 = scalar_select %p72, %s73, %s74
      %p78 = pneg %p72
      %p79 = scmp.eq.s32.totalorder %s17, 3
      %p80 = por %p78, %p79
      %p81 = scmp.ne.s32.totalorder %s73, %s76
      %p82 = scmp.eq.s32.totalorder %s17, 0
      %p83 = por %p81, %p82
      %p84 = scmp.ne.s32.totalorder %s73, %s76
      %p85 = scmp.eq.s32.totalorder %s22, 3
      %p86 = por %p84, %p85
      %p87 = scmp.ne.s32.totalorder %s76, %s77
      %p88 = scmp.eq.s32.totalorder %s22, 0
      %p89 = por %p87, %p88
      %p90 = scmp.ne.s32.totalorder %s76, %s77
      %p91 = scmp.eq.s32.totalorder %s23, 3
      %p92 = por %p90, %p91
      %p94 = scmp.ne.s32.totalorder %s77, %s93
      %p95 = scmp.eq.s32.totalorder %s23, 0
      %p96 = por %p94, %p95
      %s97 = ssub.s32 %s24, %s36
      %p98 = scmp.eq.s32.totalorder %s97, 0
      %s100 = sadd.s32 %s99, 1
      %s101 = scalar_select %p98, %s99, %s100
      %p104 = pneg %p98
      %p105 = scmp.eq.s32.totalorder %s17, 3
      %p106 = por %p104, %p105
      %p107 = scmp.ne.s32.totalorder %s99, %s102
      %p108 = scmp.eq.s32.totalorder %s17, 0
      %p109 = por %p107, %p108
      %p110 = scmp.ne.s32.totalorder %s99, %s102
      %p111 = scmp.eq.s32.totalorder %s22, 3
      %p112 = por %p110, %p111
      %p113 = scmp.ne.s32.totalorder %s102, %s103
      %p114 = scmp.eq.s32.totalorder %s22, 0
      %p115 = por %p113, %p114
      %p116 = scmp.ne.s32.totalorder %s102, %s103
      %p117 = scmp.eq.s32.totalorder %s23, 3
      %p118 = por %p116, %p117
      %p120 = scmp.ne.s32.totalorder %s103, %s119
      %p121 = scmp.eq.s32.totalorder %s23, 0
      %p122 = por %p120, %p121
      %p123 = scmp.le.s32.totalorder 1, %s17
      %p124 = scmp.lt.s32.totalorder %s17, 5
      %p125 = pnand %p123, %p124
      %p126 = pneg %p125
      // Predicated region
      $region9: #{tpu_custom_call.1} parent=5 // pred_check
        _
      $region10: #{tpu_custom_call.1} parent=5 // pred_check_branch
        %128 = sbr.rel (%p125) target = $region12
      $region11: #{tpu_custom_call.1} parent=5 // pred_region
        %s129 = ssub.s32 %s17, 1
      $region12: #{tpu_custom_call.1} parent=5 // pred_fallthru
        _
      %p130 = scmp.lt.s32.totalorder %s17, 4
      // Predicated region
      $region13: #{tpu_custom_call.1} parent=5 // pred_check
        %p131 = pneg %p130
      $region14: #{tpu_custom_call.1} parent=5 // pred_check_branch
        %133 = sbr.rel (%p131) target = $region16
      $region15: #{tpu_custom_call.1} parent=5 // pred_region
        // Predicated region
        $region17: #{tpu_custom_call.1} parent=15 // pred_check
          %p134 = pneg %p53
        $region18: #{tpu_custom_call.1} parent=15 // pred_check_branch
          %136 = sbr.rel (%p134) target = $region20
        $region19: #{tpu_custom_call.1} parent=15 // pred_region
          %s137 = sand.u32 %s43, 1
          %s138 = scalar_lea.sflag [#allocation4], %s137
          %s139 = sand.u32 %s43, 1
          %s140 = smul.addr %s139, 16
          %s141 = scalar_lea.vmem [#allocation3], %s140
          %s142 = smul.u32 %s24, 2
          %s143 = sadd.s32 %s142, %s25
          %s144 = smul.u32 2, %s143
          %s146 = ssub.s32 256, 256
          %147 = vsyncadd %s138, %s146
          %s148 = smul.addr %s144, 128
          %s149 = scalar_lea.hbm %s0, %s148
          %s151 = sshll.u32 %s141, 4
          %s152 = int_to_ptr.vmem [resolvable:$true] %s151
          %154 = dma.hbm_to_vmem [thread:$0]  %s149, 256, %s152, %s138
        $region20: #{tpu_custom_call.1} parent=15 // pred_fallthru
          _
        // Predicated region
        $region21: #{tpu_custom_call.1} parent=15 // pred_check
          %p155 = pneg %p83
        $region22: #{tpu_custom_call.1} parent=15 // pred_check_branch
          %157 = sbr.rel (%p155) target = $region24
        $region23: #{tpu_custom_call.1} parent=15 // pred_region
          %s158 = sand.u32 %s73, 1
          %s159 = scalar_lea.sflag [#allocation7], %s158
          %s160 = sand.u32 %s73, 1
          %s161 = smul.addr %s160, 128
          %s162 = scalar_lea.vmem [#allocation6], %s161
          %s163 = smul.u32 %s24, 2
          %s164 = sadd.s32 %s163, %s25
          %s165 = smul.u32 2, %s164
          %s167 = ssub.s32 2048, 2048
          %168 = vsyncadd %s159, %s167
          %s169 = smul.addr %s165, 64
          %s170 = scalar_lea.hbm %s1, %s169
          %s171 = sshll.u32 %s162, 4
          %s172 = int_to_ptr.vmem [resolvable:$true] %s171
          %177 = dma.hbm_to_vmem [thread:$0]  %s170, 2048, %s172, %s159, 512, 128, 8
        $region24: #{tpu_custom_call.1} parent=15 // pred_fallthru
          _
      $region16: #{tpu_custom_call.1} parent=5 // pred_fallthru
        _
      %p178 = scmp.le.s32.totalorder 1, %s17
      %p179 = scmp.lt.s32.totalorder %s17, 5
      %p180 = pnand %p178, %p179
      %p181 = pneg %p180
      // Predicated region
      $region25: #{tpu_custom_call.1} parent=5 // pred_check
        _
      $region26: #{tpu_custom_call.1} parent=5 // pred_check_branch
        %183 = sbr.rel (%p180) target = $region28
      $region27: #{tpu_custom_call.1} parent=5 // pred_region
        %s184 = ssub.s32 %s17, 1
        %s185 = sand.u32 %s46, 1
        %s186 = scalar_lea.sflag [#allocation4], %s185
        %s187 = sand.u32 %s46, 1
        %s188 = smul.addr %s187, 16
        %s189 = scalar_lea.vmem [#allocation3], %s188
        // Predicated region
        $region29: #{tpu_custom_call.1} parent=27 // pred_check
          %p190 = pneg %p59
        $region30: #{tpu_custom_call.1} parent=27 // pred_check_branch
          %192 = sbr.rel (%p190) target = $region32
        $region31: #{tpu_custom_call.1} parent=27 // pred_region
          %193 = dma.done %s186, 256
        $region32: #{tpu_custom_call.1} parent=27 // pred_fallthru
          _
        %s194 = sand.u32 %s76, 1
        %s195 = scalar_lea.sflag [#allocation7], %s194
        %s196 = sand.u32 %s76, 1
        %s197 = smul.addr %s196, 128
        %s198 = scalar_lea.vmem [#allocation6], %s197
        // Predicated region
        $region33: #{tpu_custom_call.1} parent=27 // pred_check
          %p199 = pneg %p89
        $region34: #{tpu_custom_call.1} parent=27 // pred_check_branch
          %201 = sbr.rel (%p199) target = $region36
        $region35: #{tpu_custom_call.1} parent=27 // pred_region
          %202 = dma.done %s195, 2048
        $region36: #{tpu_custom_call.1} parent=27 // pred_fallthru
          _
        %s203 = sand.u32 %s46, 1
        %s204 = scalar_lea.sflag [#allocation4], %s203
        %s205 = sand.u32 %s46, 1
        %s206 = smul.addr %s205, 16
        %s207 = scalar_lea.vmem [#allocation3], %s206
        %p208 = pneg %p59
        %p209 = pneg %p56
        %s210 = sand.u32 %s76, 1
        %s211 = scalar_lea.sflag [#allocation7], %s210
        %s212 = sand.u32 %s76, 1
        %s213 = smul.addr %s212, 128
        %s214 = scalar_lea.vmem [#allocation6], %s213
        %p215 = pneg %p89
        %p216 = pneg %p86
        %p217 = pneg %p115
        %p218 = pneg %p112
        %s219 = sand.u32 %s102, 1
        %s220 = scalar_lea.sflag [#allocation5], %s219
        %s221 = sand.u32 %s102, 1
        %s222 = smul.addr %s221, 8
        %s223 = scalar_lea.vmem [#allocation8], %s222
        %s224 = smul.u32 %s26, 2
        %s225 = sadd.s32 %s224, %s27
        %s226 = smul.u32 2, %s225
        %s227 = smul.u32 %s26, 2
        %s228 = sadd.s32 %s227, %s27
        %s229 = smul.u32 2, %s228
        %p231 = scmp.eq.s32.totalorder %s27, 0
        // Predicated region
        $region37: #{tpu_custom_call.1} parent=27 // pred_check
          %p232 = pneg %p231
        $region38: #{tpu_custom_call.1} parent=27 // pred_check_branch
          %234 = sbr.rel (%p232) target = $region40
        $region39: #{tpu_custom_call.1} parent=27 // pred_region
          %235 = vst [vmem:[#allocation2] sm:$0xff] 0.0
        $region40: #{tpu_custom_call.1} parent=27 // pred_fallthru
          _
        %v236 = vld [vmem:[%s189] sm:$0xff]
        %v237 = vld [vmem:[%s189 + $0x8] sm:$0xff]
        %v238 = vpack.c.bf16 %v236, %v236
        %v239 = vpack.c.bf16 %v237, %v237
        %v240 = vld [vmem:[#allocation2] sm:$0xff]
        %v241 = vld [vmem:[%s198] sm:$0xff]
        %v242 = vld [vmem:[%s198 + $0x8] sm:$0xff]
        %v243 = vld [vmem:[%s198 + $0x10] sm:$0xff]
        %v244 = vld [vmem:[%s198 + $0x18] sm:$0xff]
        %v245 = vld [vmem:[%s198 + $0x20] sm:$0xff]
        %v246 = vld [vmem:[%s198 + $0x28] sm:$0xff]
        %v247 = vld [vmem:[%s198 + $0x30] sm:$0xff]
        %v248 = vld [vmem:[%s198 + $0x38] sm:$0xff]
        %v249 = vld [vmem:[%s198 + $0x40] sm:$0xff]
        %v250 = vld [vmem:[%s198 + $0x48] sm:$0xff]
        %v251 = vld [vmem:[%s198 + $0x50] sm:$0xff]
        %v252 = vld [vmem:[%s198 + $0x58] sm:$0xff]
        %v253 = vld [vmem:[%s198 + $0x60] sm:$0xff]
        %v254 = vld [vmem:[%s198 + $0x68] sm:$0xff]
        %v255 = vld [vmem:[%s198 + $0x70] sm:$0xff]
        %v256 = vld [vmem:[%s198 + $0x78] sm:$0xff]
        %v273 = vunpack.c.l.b16 %v241
        %v274 = vunpack.c.h.b16 %v241
        %v275 = vunpack.c.l.b16 %v242
        %v276 = vunpack.c.h.b16 %v242
        %v277 = vunpack.c.l.b16 %v243
        %v278 = vunpack.c.h.b16 %v243
        %v279 = vunpack.c.l.b16 %v244
        %v280 = vunpack.c.h.b16 %v244
        %v281 = vunpack.c.l.b16 %v245
        %v282 = vunpack.c.h.b16 %v245
        %v283 = vunpack.c.l.b16 %v246
        %v284 = vunpack.c.h.b16 %v246
        %v285 = vunpack.c.l.b16 %v247
        %v286 = vunpack.c.h.b16 %v247
        %v287 = vunpack.c.l.b16 %v248
        %v288 = vunpack.c.h.b16 %v248
        %v289 = vunpack.c.l.b16 %v249
        %v290 = vunpack.c.h.b16 %v249
        %v291 = vunpack.c.l.b16 %v250
        %v292 = vunpack.c.h.b16 %v250
        %v293 = vunpack.c.l.b16 %v251
        %v294 = vunpack.c.h.b16 %v251
        %v295 = vunpack.c.l.b16 %v252
        %v296 = vunpack.c.h.b16 %v252
        %v297 = vunpack.c.l.b16 %v253
        %v298 = vunpack.c.h.b16 %v253
        %v299 = vunpack.c.l.b16 %v254
        %v300 = vunpack.c.h.b16 %v254
        %v301 = vunpack.c.l.b16 %v255
        %v302 = vunpack.c.h.b16 %v255
        %v303 = vunpack.c.l.b16 %v256
        %v304 = vunpack.c.h.b16 %v256
        %v305 = vpack.c.b16 %v275, %v273
        %v306 = vpack.c.b16 %v276, %v274
        %v307 = vpack.c.b16 %v279, %v277
        %v308 = vpack.c.b16 %v280, %v278
        %v309 = vpack.c.b16 %v283, %v281
        %v310 = vpack.c.b16 %v284, %v282
        %v311 = vpack.c.b16 %v287, %v285
        %v312 = vpack.c.b16 %v288, %v286
        %v313 = vpack.c.b16 %v291, %v289
        %v314 = vpack.c.b16 %v292, %v290
        %v315 = vpack.c.b16 %v295, %v293
        %v316 = vpack.c.b16 %v296, %v294
        %v317 = vpack.c.b16 %v299, %v297
        %v318 = vpack.c.b16 %v300, %v298
        %v319 = vpack.c.b16 %v303, %v301
        %v320 = vpack.c.b16 %v304, %v302
        %337 = vmatprep.subr.bf16.mxu0 %v320
        %338 = vmatpush1.bf16.xpose.msra.mxu0 %v319
        %339 = vmatprep.subr.bf16.mxu0 %v318
        %340 = vmatpush1.bf16.xpose.msra.mxu0 %v317
        %341 = vmatprep.subr.bf16.mxu0 %v316
        %342 = vmatpush1.bf16.xpose.msra.mxu0 %v315
        %343 = vmatprep.subr.bf16.mxu0 %v314
        %344 = vmatpush1.bf16.xpose.msra.mxu0 %v313
        %345 = vmatprep.subr.bf16.mxu0 %v312
        %346 = vmatpush1.bf16.xpose.msra.mxu0 %v311
        %347 = vmatprep.subr.bf16.mxu0 %v310
        %348 = vmatpush1.bf16.xpose.msra.mxu0 %v309
        %349 = vmatprep.subr.bf16.mxu0 %v308
        %350 = vmatpush1.bf16.xpose.msra.mxu0 %v307
        %351 = vmatprep.subr.bf16.mxu0 %v306
        %352 = vmatpush1.bf16.xpose.msra.mxu0 %v305
        %353 = vmatprep.subr.bf16.mxu0 0
        %354 = vmatpush2.bf16.xpose.msra.mxu0 0
        %355 = vmatprep.subr.bf16.mxu0 0
        %356 = vmatpush2.bf16.xpose.msra.mxu0 0
        %357 = vmatprep.subr.bf16.mxu0 0
        %358 = vmatpush2.bf16.xpose.msra.mxu0 0
        %359 = vmatprep.subr.bf16.mxu0 0
        %360 = vmatpush2.bf16.xpose.msra.mxu0 0
        %361 = vmatprep.subr.bf16.mxu0 0
        %362 = vmatpush2.bf16.xpose.msra.mxu0 0
        %363 = vmatprep.subr.bf16.mxu0 0
        %364 = vmatpush2.bf16.xpose.msra.mxu0 0
        %365 = vmatprep.subr.bf16.mxu0 0
        %366 = vmatpush2.bf16.xpose.msra.mxu0 0
        %367 = vmatprep.subr.bf16.mxu0 0
        %368 = vmatpush2.bf16.xpose.msra.mxu0 0
        %369 = vmatprep.mubr.bf16.mxu0 %v239
        %370 = vmatmul.mubr.bf16.gmra.mxu0 %v238
        %v371 = vpop.f32.mrf.mxu0
        %v372 = vadd.f32 0.0, %v371
        %v373 = vpop.f32.mrf.mxu0
        %v374 = vpop.f32.mrf.mxu0
        %v375 = vpop.f32.mrf.mxu0
        %376 = vdwg.mxu0
        %v377 = vadd.f32 %v240, %v372
        %378 = vst [vmem:[#allocation2] sm:$0xff] %v377
        %p379 = scmp.eq.s32.totalorder %s27, 1
        // Predicated region
        $region41: #{tpu_custom_call.1} parent=27 // pred_check
          %p380 = pneg %p379
        $region42: #{tpu_custom_call.1} parent=27 // pred_check_branch
          %382 = sbr.rel (%p380) target = $region44
        $region43: #{tpu_custom_call.1} parent=27 // pred_region
          %v383 = vld [vmem:[#allocation2] sm:$0xff]
          %384 = vst [vmem:[%s223] sm:$0xff] %v383
        $region44: #{tpu_custom_call.1} parent=27 // pred_fallthru
          _
        %s385 = sand.u32 %s102, 1
        %s386 = scalar_lea.sflag [#allocation5], %s385
        %s387 = sand.u32 %s102, 1
        %s388 = smul.addr %s387, 8
        %s389 = scalar_lea.vmem [#allocation8], %s388
        // Predicated region
        $region45: #{tpu_custom_call.1} parent=27 // pred_check
          %p390 = pneg %p112
        $region46: #{tpu_custom_call.1} parent=27 // pred_check_branch
          %392 = sbr.rel (%p390) target = $region48
        $region47: #{tpu_custom_call.1} parent=27 // pred_region
          %s394 = ssub.s32 128, 128
          %395 = vsyncadd %s386, %s394
          %s396 = smul.addr %s26, 128
          %s397 = scalar_lea.hbm %s2, %s396
          %s399 = sshll.u32 %s389, 4
          %s400 = int_to_ptr.vmem [resolvable:$true] %s399
          %402 = dma.vmem_to_hbm [thread:$0]  %s400, 128, %s397, %s386
        $region48: #{tpu_custom_call.1} parent=27 // pred_fallthru
          _
      $region28: #{tpu_custom_call.1} parent=5 // pred_fallthru
        _
      %p403 = scmp.le.s32.totalorder 2, %s17
      // Predicated region
      $region49: #{tpu_custom_call.1} parent=5 // pred_check
        %p404 = pneg %p403
      $region50: #{tpu_custom_call.1} parent=5 // pred_check_branch
        %406 = sbr.rel (%p404) target = $region52
      $region51: #{tpu_custom_call.1} parent=5 // pred_region
        %s407 = ssub.s32 %s17, 2
        // Predicated region
        $region53: #{tpu_custom_call.1} parent=51 // pred_check
          %p408 = pneg %p118
        $region54: #{tpu_custom_call.1} parent=51 // pred_check_branch
          %410 = sbr.rel (%p408) target = $region56
        $region55: #{tpu_custom_call.1} parent=51 // pred_region
          %s411 = sand.u32 %s103, 1
          %s412 = scalar_lea.sflag [#allocation5], %s411
          %s413 = sand.u32 %s103, 1
          %s414 = smul.addr %s413, 8
          %s415 = scalar_lea.vmem [#allocation8], %s414
          %416 = dma.done %s412, 128
        $region56: #{tpu_custom_call.1} parent=51 // pred_fallthru
          _
      $region52: #{tpu_custom_call.1} parent=5 // pred_fallthru
        _
    $region6: #{tpu_custom_call.1} parent=1 // loop_footer
      %s21 = sadd.s32 1, %s17
    $region7: #{tpu_custom_call.1} parent=1 // loop_footer_branch
      %16 = sbr.rel target = $region3
    $region8: #{tpu_custom_call.1} parent=1 // loop_exit
      _
    %417 = vsyncpa [#allocation4], 1
    %s418 = scalar_lea.sflag [#allocation4], 1
    %419 = vsyncpa %s418, 1
    %420 = vsyncpa [#allocation7], 1
    %s421 = scalar_lea.sflag [#allocation7], 1
    %422 = vsyncpa %s421, 1
    %423 = vsyncpa [#allocation5], 1
    %s424 = scalar_lea.sflag [#allocation5], 1
    %425 = vsyncpa %s424, 1

</llo_original>
